<compile_context>
chip_gen: v7x
topology: tpu7x:2x2x1
jax: 0.10.0
libtpu: 0.0.40
codegen_flags: <defaults>
</compile_context>

<pallas_src>
import jax
import jax.numpy as jnp
from jax.experimental import pallas as pl
from jax.experimental.pallas import tpu as pltpu

FUSE_W = (0.6, 0.3, 0.1)  # fuse_kernel init values from __init__


def _detail_loss_kernel(gt_ref, logit_ref, out_ref):
    """Per-sample kernel.

    gt_ref    : (1, H, W) bf16 binary gt mask
    logit_ref : (1, H, W) f32 boundary logits
    out_ref   : (1, 1, 128) f32 [bce_sum, intersection, sigmoid_sum, target_sum, 0...]
    """
    H = logit_ref.shape[1]
    W = logit_ref.shape[2]

    g = gt_ref[0].astype(jnp.float32)  # binary -> exact upcast
    ri = jax.lax.broadcasted_iota(jnp.int32, (H, W), 0)
    ci = jax.lax.broadcasted_iota(jnp.int32, (H, W), 1)

    # ---- 3x3 Laplacian conv, padding=1, clamp(min=0) -----------------------
    # Separable box sum: rows (sublane rolls) then columns (lane rolls); the
    # zero halo of padding=1 is applied with boundary masks on the wrapped rows.
    dn = pltpu.roll(g, shift=1, axis=0)          # dn[i] = g[i-1]   (wrap @ i=0)
    up = pltpu.roll(g, shift=H - 1, axis=0)      # up[i] = g[i+1]   (wrap @ i=H-1)
    rowsum = (g
              + jnp.where(ri >= 1, dn, 0.0)
              + jnp.where(ri <= H - 2, up, 0.0))
    rt = pltpu.roll(rowsum, shift=1, axis=1)     # rt[j] = rowsum[j-1]
    lf = pltpu.roll(rowsum, shift=W - 1, axis=1) # lf[j] = rowsum[j+1]
    box = (rowsum
           + jnp.where(ci >= 1, rt, 0.0)
           + jnp.where(ci <= W - 2, lf, 0.0))
    # 8*center - (box - center) == 9*center - box
    lap = jnp.maximum(9.0 * g - box, 0.0)

    bt = (lap > 0.1).astype(jnp.float32)

    # ---- nearest down(s)/up(s): out[i,j] = lap[(i//s)*s, (j//s)*s] ----------
    even_r = (ri & 1) == 0
    even_c = (ci & 1) == 0
    lo4_r = (ri & 3) < 2
    lo4_c = (ci & 3) < 2

    d2r = jnp.where(even_r, lap, pltpu.roll(lap, shift=1, axis=0))   # rows //2*2
    d4r = jnp.where(lo4_r, d2r, pltpu.roll(d2r, shift=2, axis=0))    # rows //4*4
    d2 = jnp.where(even_c, d2r, pltpu.roll(d2r, shift=1, axis=1))    # +cols //2*2
    d4c = jnp.where(even_c, d4r, pltpu.roll(d4r, shift=1, axis=1))
    d4 = jnp.where(lo4_c, d4c, pltpu.roll(d4c, shift=2, axis=1))     # +cols //4*4

    x2u = (d2 > 0.1).astype(jnp.float32)
    x4u = (d4 > 0.1).astype(jnp.float32)

    # 1x1 fuse conv with fixed init weights, then threshold -> binary target
    fused = FUSE_W[0] * bt + FUSE_W[1] * x2u + FUSE_W[2] * x4u
    target = (fused > 0.1).astype(jnp.float32)

    # ---- BCE-with-logits + dice statistics (single shared exp) -------------
    x = logit_ref[0]
    e = jnp.exp(-jnp.abs(x))                       # one transcendental / elem
    bce = jnp.maximum(x, 0.0) - x * target + jnp.log1p(e)
    p = jnp.where(x >= 0.0, 1.0, e) / (1.0 + e)    # == sigmoid(x)

    bce_sum = jnp.sum(bce)
    inter = jnp.sum(p * target)
    psum = jnp.sum(p)
    tsum = jnp.sum(target)

    # Single unmasked 128-lane store; the 4 selects below are one vreg each.
    lane = jax.lax.broadcasted_iota(jnp.int32, (1, 128), 1)
    row = (jnp.where(lane == 0, bce_sum, 0.0)
           + jnp.where(lane == 1, inter, 0.0)
           + jnp.where(lane == 2, psum, 0.0)
           + jnp.where(lane == 3, tsum, 0.0))
    out_ref[0] = row


@jax.jit
def detail_aggregate_loss(boundary_logits, gtmasks):
    """boundary_logits: (N, H, W) float32 logits; gtmasks: (N, H, W) 0/1 mask."""
    N, H, W = gtmasks.shape
    assert boundary_logits.shape == (N, H, W)
    # Sublane/lane-native sizes keep every roll/mask on native vreg tiles.
    # TODO(synk): pad H to a multiple of 8 / W to a multiple of 128 (with edge
    #             masks) to support arbitrary image sizes.
    assert H % 8 == 0 and W % 128 == 0, (H, W)

    gt_bf16 = gtmasks.astype(jnp.bfloat16)          # binary -> exact in bf16
    logits = boundary_logits.astype(jnp.float32)

    # ~28 live f32 (H,W) planes of headroom, capped to fit v7x's 64 MiB VMEM.
    vmem_limit = int(min(56 * 2**20, max(16 * 2**20, 28 * H * W * 4)))

    stats = pl.pallas_call(
        _detail_loss_kernel,
        out_shape=jax.ShapeDtypeStruct((N, 1, 128), jnp.float32),
        grid=(N,),
        in_specs=[
            pl.BlockSpec((1, H, W), lambda n: (n, 0, 0)),   # gt (bf16)
            pl.BlockSpec((1, H, W), lambda n: (n, 0, 0)),   # logits (f32)
        ],
        out_specs=pl.BlockSpec((1, 1, 128), lambda n: (n, 0, 0)),
        compiler_params=pltpu.CompilerParams(
            dimension_semantics=("parallel",),
            vmem_limit_bytes=vmem_limit),
    )(gt_bf16, logits)

    bce_sum = stats[:, 0, 0]
    inter = stats[:, 0, 1]
    psum = stats[:, 0, 2]
    tsum = stats[:, 0, 3]

    smooth = 1.0
    bce = jnp.sum(bce_sum) / (N * H * W)
    dice = jnp.mean(1.0 - (2.0 * inter + smooth) / (psum + tsum + smooth))
    return {"loss_detail": 0.1 * (bce + dice)}


def _reference_loss(boundary_logits, gtmasks):
    """Pure-JAX reference mirroring the PyTorch forward, for verification."""
    N, H, W = gtmasks.shape
    g = jnp.pad(gtmasks, ((0, 0), (1, 1), (1, 1)))
    neigh = (g[:, 0:H, 0:W] + g[:, 0:H, 1:W + 1] + g[:, 0:H, 2:W + 2]
             + g[:, 1:H + 1, 0:W] + g[:, 1:H + 1, 2:W + 2]
             + g[:, 2:H + 2, 0:W] + g[:, 2:H + 2, 1:W + 1] + g[:, 2:H + 2, 2:W + 2])
    lap = jnp.maximum(8.0 * g[:, 1:H + 1, 1:W + 1] - neigh, 0.0)
    bt = (lap > 0.1).astype(jnp.float32)

    def downup(x, s):
        d = x[:, ::s, ::s]
        return jnp.repeat(jnp.repeat(d, s, axis=1), s, axis=2)

    x2u = (downup(lap, 2) > 0.1).astype(jnp.float32)
    x4u = (downup(lap, 4) > 0.1).astype(jnp.float32)
    target = ((FUSE_W[0] * bt + FUSE_W[1] * x2u + FUSE_W[2] * x4u) > 0.1
              ).astype(jnp.float32)

    x = boundary_logits
    bce = jnp.mean(jnp.maximum(x, 0.0) - x * target + jnp.log1p(jnp.exp(-jnp.abs(x))))
    p = jax.nn.sigmoid(x).reshape(N, -1)
    t = target.reshape(N, -1)
    smooth = 1.0
    dice = jnp.mean(1.0 - (2.0 * jnp.sum(p * t, -1) + smooth)
                    / (jnp.sum(p, -1) + jnp.sum(t, -1) + smooth))
    return 0.1 * (bce + dice)


if __name__ == "__main__":
    key = jax.random.PRNGKey(0)
    k1, k2 = jax.random.split(key)
    N, H, W = 2, 16, 128
    gtmasks = (jax.random.uniform(k1, (N, H, W)) > 0.5).astype(jnp.float32)
    boundary_logits = jax.random.normal(k2, (N, H, W), dtype=jnp.float32)

    out = detail_aggregate_loss(boundary_logits, gtmasks)
    loss = jax.block_until_ready(out["loss_detail"])

    ref = jax.block_until_ready(_reference_loss(boundary_logits, gtmasks))
    assert jnp.allclose(loss, ref, rtol=1e-5, atol=1e-5), (loss, ref)
    print("KERNEL_OK")
</pallas_src>

<mosaic_0001>
module attributes {stable_mosaic.version = 11 : i64} {
  func.func @_detail_loss_kernel(%arg0: i32, %arg1: memref<1x16x128xbf16, #tpu.memory_space<vmem>>, %arg2: memref<1x16x128xf32, #tpu.memory_space<vmem>>, %arg3: memref<1x1x128xf32, #tpu.memory_space<vmem>>) attributes {dimension_semantics = [#tpu.dimension_semantics<parallel>], iteration_bounds = array<i64: 2>, scalar_prefetch = 0 : i64, scratch_operands = 0 : i64, tpu.core_type = #tpu.core_type<tc>, window_params = [{transform_indices = @transform_0, window_bounds = array<i64: 1, 16, 128>}, {transform_indices = @transform_1, window_bounds = array<i64: 1, 16, 128>}, {transform_indices = @transform_2, window_bounds = array<i64: 1, 1, 128>}]} {
    %c0 = arith.constant 0 : index
    %c0_0 = arith.constant 0 : index
    %c0_1 = arith.constant 0 : index
    %0 = vector.load %arg1[%c0, %c0_0, %c0_1] : memref<1x16x128xbf16, #tpu.memory_space<vmem>>, vector<1x16x128xbf16>
    %1 = vector.shape_cast %0 : vector<1x16x128xbf16> to vector<16x128xbf16>
    %2 = arith.extf %1 : vector<16x128xbf16> to vector<16x128xf32>
    %3 = tpu.iota {dimensions = array<i32: 0>} : vector<16x128xi32>
    %4 = tpu.iota {dimensions = array<i32: 1>} : vector<16x128xi32>
    %c1_i32 = arith.constant 1 : i32
    %5 = tpu.dynamic_rotate %2 by %c1_i32 dim 0 : vector<16x128xf32>, i32 -> vector<16x128xf32>
    %c15_i32 = arith.constant 15 : i32
    %6 = tpu.dynamic_rotate %2 by %c15_i32 dim 0 : vector<16x128xf32>, i32 -> vector<16x128xf32>
    %c1_i32_2 = arith.constant 1 : i32
    %7 = vector.broadcast %c1_i32_2 : i32 to vector<16x128xi32>
    %8 = arith.cmpi sge, %3, %7 : vector<16x128xi32>
    %cst = arith.constant 0.000000e+00 : f32
    %9 = vector.broadcast %cst : f32 to vector<16x128xf32>
    %10 = arith.select %8, %5, %9 : vector<16x128xi1>, vector<16x128xf32>
    %11 = arith.addf %2, %10 : vector<16x128xf32>
    %c14_i32 = arith.constant 14 : i32
    %12 = vector.broadcast %c14_i32 : i32 to vector<16x128xi32>
    %13 = arith.cmpi sle, %3, %12 : vector<16x128xi32>
    %cst_3 = arith.constant 0.000000e+00 : f32
    %14 = vector.broadcast %cst_3 : f32 to vector<16x128xf32>
    %15 = arith.select %13, %6, %14 : vector<16x128xi1>, vector<16x128xf32>
    %16 = arith.addf %11, %15 : vector<16x128xf32>
    %c1_i32_4 = arith.constant 1 : i32
    %17 = tpu.dynamic_rotate %16 by %c1_i32_4 dim 1 : vector<16x128xf32>, i32 -> vector<16x128xf32>
    %c127_i32 = arith.constant 127 : i32
    %18 = tpu.dynamic_rotate %16 by %c127_i32 dim 1 : vector<16x128xf32>, i32 -> vector<16x128xf32>
    %c1_i32_5 = arith.constant 1 : i32
    %19 = vector.broadcast %c1_i32_5 : i32 to vector<16x128xi32>
    %20 = arith.cmpi sge, %4, %19 : vector<16x128xi32>
    %cst_6 = arith.constant 0.000000e+00 : f32
    %21 = vector.broadcast %cst_6 : f32 to vector<16x128xf32>
    %22 = arith.select %20, %17, %21 : vector<16x128xi1>, vector<16x128xf32>
    %23 = arith.addf %16, %22 : vector<16x128xf32>
    %c126_i32 = arith.constant 126 : i32
    %24 = vector.broadcast %c126_i32 : i32 to vector<16x128xi32>
    %25 = arith.cmpi sle, %4, %24 : vector<16x128xi32>
    %cst_7 = arith.constant 0.000000e+00 : f32
    %26 = vector.broadcast %cst_7 : f32 to vector<16x128xf32>
    %27 = arith.select %25, %18, %26 : vector<16x128xi1>, vector<16x128xf32>
    %28 = arith.addf %23, %27 : vector<16x128xf32>
    %cst_8 = arith.constant 9.000000e+00 : f32
    %29 = vector.broadcast %cst_8 : f32 to vector<16x128xf32>
    %30 = arith.mulf %29, %2 : vector<16x128xf32>
    %31 = arith.subf %30, %28 : vector<16x128xf32>
    %cst_9 = arith.constant 0.000000e+00 : f32
    %32 = vector.broadcast %cst_9 : f32 to vector<16x128xf32>
    %33 = arith.maximumf %31, %32 : vector<16x128xf32>
    %cst_10 = arith.constant 1.000000e-01 : f32
    %34 = vector.broadcast %cst_10 : f32 to vector<16x128xf32>
    %35 = arith.cmpf ogt, %33, %34 : vector<16x128xf32>
    %36 = arith.extui %35 : vector<16x128xi1> to vector<16x128xi32>
    %37 = arith.sitofp %36 : vector<16x128xi32> to vector<16x128xf32>
    %c1_i32_11 = arith.constant 1 : i32
    %38 = vector.broadcast %c1_i32_11 : i32 to vector<16x128xi32>
    %39 = arith.andi %3, %38 : vector<16x128xi32>
    %c0_i32 = arith.constant 0 : i32
    %40 = vector.broadcast %c0_i32 : i32 to vector<16x128xi32>
    %41 = arith.cmpi eq, %39, %40 : vector<16x128xi32>
    %c1_i32_12 = arith.constant 1 : i32
    %42 = vector.broadcast %c1_i32_12 : i32 to vector<16x128xi32>
    %43 = arith.andi %4, %42 : vector<16x128xi32>
    %c0_i32_13 = arith.constant 0 : i32
    %44 = vector.broadcast %c0_i32_13 : i32 to vector<16x128xi32>
    %45 = arith.cmpi eq, %43, %44 : vector<16x128xi32>
    %c3_i32 = arith.constant 3 : i32
    %46 = vector.broadcast %c3_i32 : i32 to vector<16x128xi32>
    %47 = arith.andi %3, %46 : vector<16x128xi32>
    %c2_i32 = arith.constant 2 : i32
    %48 = vector.broadcast %c2_i32 : i32 to vector<16x128xi32>
    %49 = arith.cmpi slt, %47, %48 : vector<16x128xi32>
    %c3_i32_14 = arith.constant 3 : i32
    %50 = vector.broadcast %c3_i32_14 : i32 to vector<16x128xi32>
    %51 = arith.andi %4, %50 : vector<16x128xi32>
    %c2_i32_15 = arith.constant 2 : i32
    %52 = vector.broadcast %c2_i32_15 : i32 to vector<16x128xi32>
    %53 = arith.cmpi slt, %51, %52 : vector<16x128xi32>
    %c1_i32_16 = arith.constant 1 : i32
    %54 = tpu.dynamic_rotate %33 by %c1_i32_16 dim 0 : vector<16x128xf32>, i32 -> vector<16x128xf32>
    %55 = arith.select %41, %33, %54 : vector<16x128xi1>, vector<16x128xf32>
    %c2_i32_17 = arith.constant 2 : i32
    %56 = tpu.dynamic_rotate %55 by %c2_i32_17 dim 0 : vector<16x128xf32>, i32 -> vector<16x128xf32>
    %57 = arith.select %49, %55, %56 : vector<16x128xi1>, vector<16x128xf32>
    %c1_i32_18 = arith.constant 1 : i32
    %58 = tpu.dynamic_rotate %55 by %c1_i32_18 dim 1 : vector<16x128xf32>, i32 -> vector<16x128xf32>
    %59 = arith.select %45, %55, %58 : vector<16x128xi1>, vector<16x128xf32>
    %c1_i32_19 = arith.constant 1 : i32
    %60 = tpu.dynamic_rotate %57 by %c1_i32_19 dim 1 : vector<16x128xf32>, i32 -> vector<16x128xf32>
    %61 = arith.select %45, %57, %60 : vector<16x128xi1>, vector<16x128xf32>
    %c2_i32_20 = arith.constant 2 : i32
    %62 = tpu.dynamic_rotate %61 by %c2_i32_20 dim 1 : vector<16x128xf32>, i32 -> vector<16x128xf32>
    %63 = arith.select %53, %61, %62 : vector<16x128xi1>, vector<16x128xf32>
    %cst_21 = arith.constant 1.000000e-01 : f32
    %64 = vector.broadcast %cst_21 : f32 to vector<16x128xf32>
    %65 = arith.cmpf ogt, %59, %64 : vector<16x128xf32>
    %66 = arith.extui %65 : vector<16x128xi1> to vector<16x128xi32>
    %67 = arith.sitofp %66 : vector<16x128xi32> to vector<16x128xf32>
    %cst_22 = arith.constant 1.000000e-01 : f32
    %68 = vector.broadcast %cst_22 : f32 to vector<16x128xf32>
    %69 = arith.cmpf ogt, %63, %68 : vector<16x128xf32>
    %70 = arith.extui %69 : vector<16x128xi1> to vector<16x128xi32>
    %71 = arith.sitofp %70 : vector<16x128xi32> to vector<16x128xf32>
    %cst_23 = arith.constant 6.000000e-01 : f32
    %72 = vector.broadcast %cst_23 : f32 to vector<16x128xf32>
    %73 = arith.mulf %72, %37 : vector<16x128xf32>
    %cst_24 = arith.constant 3.000000e-01 : f32
    %74 = vector.broadcast %cst_24 : f32 to vector<16x128xf32>
    %75 = arith.mulf %74, %67 : vector<16x128xf32>
    %76 = arith.addf %73, %75 : vector<16x128xf32>
    %cst_25 = arith.constant 1.000000e-01 : f32
    %77 = vector.broadcast %cst_25 : f32 to vector<16x128xf32>
    %78 = arith.mulf %77, %71 : vector<16x128xf32>
    %79 = arith.addf %76, %78 : vector<16x128xf32>
    %cst_26 = arith.constant 1.000000e-01 : f32
    %80 = vector.broadcast %cst_26 : f32 to vector<16x128xf32>
    %81 = arith.cmpf ogt, %79, %80 : vector<16x128xf32>
    %82 = arith.extui %81 : vector<16x128xi1> to vector<16x128xi32>
    %83 = arith.sitofp %82 : vector<16x128xi32> to vector<16x128xf32>
    %c0_27 = arith.constant 0 : index
    %c0_28 = arith.constant 0 : index
    %c0_29 = arith.constant 0 : index
    %84 = vector.load %arg2[%c0_27, %c0_28, %c0_29] : memref<1x16x128xf32, #tpu.memory_space<vmem>>, vector<1x16x128xf32>
    %85 = vector.shape_cast %84 : vector<1x16x128xf32> to vector<16x128xf32>
    %86 = math.absf %85 : vector<16x128xf32>
    %cst_30 = arith.constant 0.000000e+00 : f32
    %87 = vector.broadcast %cst_30 : f32 to vector<16x128xf32>
    %88 = arith.subf %87, %86 : vector<16x128xf32>
    %89 = math.exp %88 : vector<16x128xf32>
    %cst_31 = arith.constant 0.000000e+00 : f32
    %90 = vector.broadcast %cst_31 : f32 to vector<16x128xf32>
    %91 = arith.maximumf %85, %90 : vector<16x128xf32>
    %92 = arith.mulf %85, %83 : vector<16x128xf32>
    %93 = arith.subf %91, %92 : vector<16x128xf32>
    %94 = math.log1p %89 : vector<16x128xf32>
    %95 = arith.addf %93, %94 : vector<16x128xf32>
    %cst_32 = arith.constant 0.000000e+00 : f32
    %96 = vector.broadcast %cst_32 : f32 to vector<16x128xf32>
    %97 = arith.cmpf oge, %85, %96 : vector<16x128xf32>
    %cst_33 = arith.constant 1.000000e+00 : f32
    %98 = vector.broadcast %cst_33 : f32 to vector<16x128xf32>
    %99 = arith.select %97, %98, %89 : vector<16x128xi1>, vector<16x128xf32>
    %cst_34 = arith.constant 1.000000e+00 : f32
    %100 = vector.broadcast %cst_34 : f32 to vector<16x128xf32>
    %101 = arith.addf %100, %89 : vector<16x128xf32>
    %102 = arith.divf %99, %101 : vector<16x128xf32>
    %103 = vector.shape_cast %95 : vector<16x128xf32> to vector<1x16x128xf32>
    %cst_35 = arith.constant dense<0.000000e+00> : vector<1xf32>
    %104 = vector.multi_reduction <add>, %103, %cst_35 [1, 2] : vector<1x16x128xf32> to vector<1xf32>
    %105 = vector.shape_cast %104 : vector<1xf32> to vector<1x1x1xf32>
    %106 = vector.extract %105[0, 0, 0] : f32 from vector<1x1x1xf32>
    %107 = arith.mulf %102, %83 : vector<16x128xf32>
    %108 = vector.shape_cast %107 : vector<16x128xf32> to vector<1x16x128xf32>
    %cst_36 = arith.constant dense<0.000000e+00> : vector<1xf32>
    %109 = vector.multi_reduction <add>, %108, %cst_36 [1, 2] : vector<1x16x128xf32> to vector<1xf32>
    %110 = vector.shape_cast %109 : vector<1xf32> to vector<1x1x1xf32>
    %111 = vector.extract %110[0, 0, 0] : f32 from vector<1x1x1xf32>
    %112 = vector.shape_cast %102 : vector<16x128xf32> to vector<1x16x128xf32>
    %cst_37 = arith.constant dense<0.000000e+00> : vector<1xf32>
    %113 = vector.multi_reduction <add>, %112, %cst_37 [1, 2] : vector<1x16x128xf32> to vector<1xf32>
    %114 = vector.shape_cast %113 : vector<1xf32> to vector<1x1x1xf32>
    %115 = vector.extract %114[0, 0, 0] : f32 from vector<1x1x1xf32>
    %116 = vector.shape_cast %83 : vector<16x128xf32> to vector<1x16x128xf32>
    %cst_38 = arith.constant dense<0.000000e+00> : vector<1xf32>
    %117 = vector.multi_reduction <add>, %116, %cst_38 [1, 2] : vector<1x16x128xf32> to vector<1xf32>
    %118 = vector.shape_cast %117 : vector<1xf32> to vector<1x1x1xf32>
    %119 = vector.extract %118[0, 0, 0] : f32 from vector<1x1x1xf32>
    %120 = tpu.iota {dimensions = array<i32: 1>} : vector<1x128xi32>
    %c0_i32_39 = arith.constant 0 : i32
    %121 = vector.broadcast %c0_i32_39 : i32 to vector<1x128xi32>
    %122 = arith.cmpi eq, %120, %121 : vector<1x128xi32>
    %cst_40 = arith.constant 0.000000e+00 : f32
    %123 = vector.broadcast %106 : f32 to vector<1x128xf32>
    %124 = vector.broadcast %cst_40 : f32 to vector<1x128xf32>
    %125 = arith.select %122, %123, %124 : vector<1x128xi1>, vector<1x128xf32>
    %c1_i32_41 = arith.constant 1 : i32
    %126 = vector.broadcast %c1_i32_41 : i32 to vector<1x128xi32>
    %127 = arith.cmpi eq, %120, %126 : vector<1x128xi32>
    %cst_42 = arith.constant 0.000000e+00 : f32
    %128 = vector.broadcast %111 : f32 to vector<1x128xf32>
    %129 = vector.broadcast %cst_42 : f32 to vector<1x128xf32>
    %130 = arith.select %127, %128, %129 : vector<1x128xi1>, vector<1x128xf32>
    %131 = arith.addf %125, %130 : vector<1x128xf32>
    %c2_i32_43 = arith.constant 2 : i32
    %132 = vector.broadcast %c2_i32_43 : i32 to vector<1x128xi32>
    %133 = arith.cmpi eq, %120, %132 : vector<1x128xi32>
    %cst_44 = arith.constant 0.000000e+00 : f32
    %134 = vector.broadcast %115 : f32 to vector<1x128xf32>
    %135 = vector.broadcast %cst_44 : f32 to vector<1x128xf32>
    %136 = arith.select %133, %134, %135 : vector<1x128xi1>, vector<1x128xf32>
    %137 = arith.addf %131, %136 : vector<1x128xf32>
    %c3_i32_45 = arith.constant 3 : i32
    %138 = vector.broadcast %c3_i32_45 : i32 to vector<1x128xi32>
    %139 = arith.cmpi eq, %120, %138 : vector<1x128xi32>
    %cst_46 = arith.constant 0.000000e+00 : f32
    %140 = vector.broadcast %119 : f32 to vector<1x128xf32>
    %141 = vector.broadcast %cst_46 : f32 to vector<1x128xf32>
    %142 = arith.select %139, %140, %141 : vector<1x128xi1>, vector<1x128xf32>
    %143 = arith.addf %137, %142 : vector<1x128xf32>
    %c0_47 = arith.constant 0 : index
    %c0_48 = arith.constant 0 : index
    %c0_49 = arith.constant 0 : index
    %144 = vector.load %arg3[%c0_47, %c0_48, %c0_49] : memref<1x1x128xf32, #tpu.memory_space<vmem>>, vector<1x1x128xf32>
    %145 = vector.shape_cast %144 : vector<1x1x128xf32> to vector<1x128xf32>
    %146 = vector.shape_cast %143 : vector<1x128xf32> to vector<1x1x128xf32>
    tpu.vector_store %arg3[%c0_47, %c0_48, %c0_49], %146 {strides = array<i32>} : memref<1x1x128xf32, #tpu.memory_space<vmem>>, vector<1x1x128xf32>,
    return
  }
  func.func @transform_0(%arg0: i32) -> (i32, i32, i32) {
    %c0_i32 = arith.constant 0 : i32
    %c0_i32_0 = arith.constant 0 : i32
    %c0_i32_1 = arith.constant 0 : i32
    return %arg0, %c0_i32, %c0_i32_0 : i32, i32, i32
  }
  func.func @transform_1(%arg0: i32) -> (i32, i32, i32) {
    %c0_i32 = arith.constant 0 : i32
    %c0_i32_0 = arith.constant 0 : i32
    %c0_i32_1 = arith.constant 0 : i32
    return %arg0, %c0_i32, %c0_i32_0 : i32, i32, i32
  }
  func.func @transform_2(%arg0: i32) -> (i32, i32, i32) {
    %c0_i32 = arith.constant 0 : i32
    %c0_i32_0 = arith.constant 0 : i32
    %c0_i32_1 = arith.constant 0 : i32
    return %arg0, %c0_i32, %c0_i32_0 : i32, i32, i32
  }
}

</mosaic_0001>

<llo_original>
// kernel: detail_aggregate_loss.1
$region0: #{detail_aggregate_loss.1}
  #allocation0 [shape = 'u32[]', space=smem, size = 0x4, offset = 0x4, fixed_abs, tag = 'smem constant byte address 0x4 - core index']
  #allocation1 [shape = 'u32[144,128]{1,0:T(1,128)}', space=vmem, size = 0x12000, scoped, tag = 'internal scratch']
  %s0 = inlined_call_operand.vmem [shape: bf16[2,16,128], index: 0, kind: input, shape index: {}]
  %s1 = inlined_call_operand.vmem [shape: f32[2,16,128], index: 1, kind: input, shape index: {}]
  %s2 = inlined_call_operand.vmem [shape: f32[2,1,128], index: 2, kind: output, shape index: {}]
  %s3 = sld [smem:[#allocation0]]
  $region41: #{detail_aggregate_loss.1} parent=0
    _
  %s5 = ssub.s32 1, %s3
  %s6 = scalar_select 0, %s5, %s3
  loop: start=0, step=1, limit=4
  $region2: #{detail_aggregate_loss.1} parent=0 // loop_pre_header
    _
  $region3: #{detail_aggregate_loss.1} parent=0 // loop_header
    %s8 = sphi 0, %s12
    %p9 = scmp.ge.s32.totalorder %s8, 4
    %s18 = sphi 0, %s20
    %s21 = sphi 0, %s18
    %s22 = sphi 0, %s21
    %s38 = sphi 0, %s22
    %s44 = sphi 0, %s46
    %s47 = sphi 0, %s44
    %s48 = sphi 0, %s47
    %s64 = sphi 0, %s48
    %s70 = sphi 0, %s72
    %s73 = sphi 0, %s70
    %s74 = sphi 0, %s73
    %s90 = sphi 0, %s74
  $region4: #{detail_aggregate_loss.1} parent=0 // loop_header_branch
    %11 = sbr.rel (%p9) target = $region8
  $region5: #{detail_aggregate_loss.1} parent=0 // loop_body
    %s13 = ssub.s32 %s8, 1
    %s14 = ssub.s32 %s8, 2
    %s15 = sadd.s32 %s8, 1
    %s16 = ssub.s32 %s8, %s15
    %p17 = scmp.eq.s32.totalorder %s16, 0
    %s19 = sadd.s32 %s18, 1
    %s20 = scalar_select %p17, %s18, %s19
    %p23 = pneg %p17
    %p24 = scmp.eq.s32.totalorder %s8, 1
    %p25 = por %p23, %p24
    %p26 = scmp.ne.s32.totalorder %s18, %s21
    %p27 = scmp.eq.s32.totalorder %s8, 0
    %p28 = por %p26, %p27
    %p29 = scmp.ne.s32.totalorder %s18, %s21
    %p30 = scmp.eq.s32.totalorder %s13, 1
    %p31 = por %p29, %p30
    %p32 = scmp.ne.s32.totalorder %s21, %s22
    %p33 = scmp.eq.s32.totalorder %s13, 0
    %p34 = por %p32, %p33
    %p35 = scmp.ne.s32.totalorder %s21, %s22
    %p36 = scmp.eq.s32.totalorder %s14, 1
    %p37 = por %p35, %p36
    %p39 = scmp.ne.s32.totalorder %s22, %s38
    %p40 = scmp.eq.s32.totalorder %s14, 0
    %p41 = por %p39, %p40
    %s42 = ssub.s32 %s8, %s15
    %p43 = scmp.eq.s32.totalorder %s42, 0
    %s45 = sadd.s32 %s44, 1
    %s46 = scalar_select %p43, %s44, %s45
    %p49 = pneg %p43
    %p50 = scmp.eq.s32.totalorder %s8, 1
    %p51 = por %p49, %p50
    %p52 = scmp.ne.s32.totalorder %s44, %s47
    %p53 = scmp.eq.s32.totalorder %s8, 0
    %p54 = por %p52, %p53
    %p55 = scmp.ne.s32.totalorder %s44, %s47
    %p56 = scmp.eq.s32.totalorder %s13, 1
    %p57 = por %p55, %p56
    %p58 = scmp.ne.s32.totalorder %s47, %s48
    %p59 = scmp.eq.s32.totalorder %s13, 0
    %p60 = por %p58, %p59
    %p61 = scmp.ne.s32.totalorder %s47, %s48
    %p62 = scmp.eq.s32.totalorder %s14, 1
    %p63 = por %p61, %p62
    %p65 = scmp.ne.s32.totalorder %s48, %s64
    %p66 = scmp.eq.s32.totalorder %s14, 0
    %p67 = por %p65, %p66
    %s68 = ssub.s32 %s8, %s15
    %p69 = scmp.eq.s32.totalorder %s68, 0
    %s71 = sadd.s32 %s70, 1
    %s72 = scalar_select %p69, %s70, %s71
    %p75 = pneg %p69
    %p76 = scmp.eq.s32.totalorder %s8, 1
    %p77 = por %p75, %p76
    %p78 = scmp.ne.s32.totalorder %s70, %s73
    %p79 = scmp.eq.s32.totalorder %s8, 0
    %p80 = por %p78, %p79
    %p81 = scmp.ne.s32.totalorder %s70, %s73
    %p82 = scmp.eq.s32.totalorder %s13, 1
    %p83 = por %p81, %p82
    %p84 = scmp.ne.s32.totalorder %s73, %s74
    %p85 = scmp.eq.s32.totalorder %s13, 0
    %p86 = por %p84, %p85
    %p87 = scmp.ne.s32.totalorder %s73, %s74
    %p88 = scmp.eq.s32.totalorder %s14, 1
    %p89 = por %p87, %p88
    %p91 = scmp.ne.s32.totalorder %s74, %s90
    %p92 = scmp.eq.s32.totalorder %s14, 0
    %p93 = por %p91, %p92
    %p94 = scmp.le.s32.totalorder 1, %s8
    %p95 = scmp.lt.s32.totalorder %s8, 3
    %p96 = pnand %p94, %p95
    %p97 = pneg %p96
    // Predicated region
    $region9: #{detail_aggregate_loss.1} parent=5 // pred_check
      _
    $region10: #{detail_aggregate_loss.1} parent=5 // pred_check_branch
      %99 = sbr.rel (%p96) target = $region12
    $region11: #{detail_aggregate_loss.1} parent=5 // pred_region
      %s100 = ssub.s32 %s8, 1
    $region12: #{detail_aggregate_loss.1} parent=5 // pred_fallthru
      _
    %p101 = scmp.lt.s32.totalorder %s8, 2
    // Predicated region
    $region13: #{detail_aggregate_loss.1} parent=5 // pred_check
      %p102 = pneg %p101
    $region14: #{detail_aggregate_loss.1} parent=5 // pred_check_branch
      %104 = sbr.rel (%p102) target = $region16
    $region15: #{detail_aggregate_loss.1} parent=5 // pred_region
      // Predicated region
      $region17: #{detail_aggregate_loss.1} parent=15 // pred_check
        %p105 = pneg %p28
      $region18: #{detail_aggregate_loss.1} parent=15 // pred_check_branch
        %107 = sbr.rel (%p105) target = $region20
      $region19: #{detail_aggregate_loss.1} parent=15 // pred_region
        %p108 = scmp.lt.s32.totalorder %s8, 1
        %s109 = scalar_select %p108, %s8, 1
        %s110 = smul.addr %s109, 2
        %s111 = smul.addr %s110, 4
        %s112 = scalar_lea.vmem %s0, %s111
      $region20: #{detail_aggregate_loss.1} parent=15 // pred_fallthru
        _
      // Predicated region
      $region21: #{detail_aggregate_loss.1} parent=15 // pred_check
        %p113 = pneg %p54
      $region22: #{detail_aggregate_loss.1} parent=15 // pred_check_branch
        %115 = sbr.rel (%p113) target = $region24
      $region23: #{detail_aggregate_loss.1} parent=15 // pred_region
        %p116 = scmp.lt.s32.totalorder %s8, 1
        %s117 = scalar_select %p116, %s8, 1
        %s118 = smul.addr %s117, 2
        %s119 = smul.addr %s118, 8
        %s120 = scalar_lea.vmem %s1, %s119
      $region24: #{detail_aggregate_loss.1} parent=15 // pred_fallthru
        _
    $region16: #{detail_aggregate_loss.1} parent=5 // pred_fallthru
      _
    %p121 = scmp.le.s32.totalorder 1, %s8
    %p122 = scmp.lt.s32.totalorder %s8, 3
    %p123 = pnand %p121, %p122
    %p124 = pneg %p123
    // Predicated region
    $region25: #{detail_aggregate_loss.1} parent=5 // pred_check
      _
    $region26: #{detail_aggregate_loss.1} parent=5 // pred_check_branch
      %126 = sbr.rel (%p123) target = $region28
    $region27: #{detail_aggregate_loss.1} parent=5 // pred_region
      %s127 = ssub.s32 %s8, 1
      %p128 = scmp.lt.s32.totalorder %s13, 1
      %s129 = scalar_select %p128, %s13, 1
      %s130 = smul.addr %s129, 2
      %s131 = smul.addr %s130, 4
      %s132 = scalar_lea.vmem %s0, %s131
      %p133 = pneg %p34
      %p134 = pneg %p31
      %p135 = scmp.lt.s32.totalorder %s13, 1
      %s136 = scalar_select %p135, %s13, 1
      %s137 = smul.addr %s136, 2
      %s138 = smul.addr %s137, 8
      %s139 = scalar_lea.vmem %s1, %s138
      %p140 = pneg %p60
      %p141 = pneg %p57
      %p142 = pneg %p86
      %p143 = pneg %p83
      %p144 = scmp.lt.s32.totalorder %s13, 1
      %s145 = scalar_select %p144, %s13, 1
      %s146 = scalar_lea.vmem %s2, %s145
      %p147 = scmp.lt.s32.totalorder %s13, 1
      %s148 = scalar_select %p147, %s13, 1
      %s149 = smul.addr %s148, 2
      %s150 = smul.addr %s149, 4
      %s151 = scalar_lea.vmem %s0, %s150
      %p152 = scmp.lt.s32.totalorder %s13, 1
      %s153 = scalar_select %p152, %s13, 1
      %s154 = smul.addr %s153, 2
      %s155 = smul.addr %s154, 8
      %s156 = scalar_lea.vmem %s1, %s155
      %p157 = scmp.lt.s32.totalorder %s13, 1
      %s158 = scalar_select %p157, %s13, 1
      %s159 = scalar_lea.vmem %s2, %s158
      %v160 = vld [vmem:[%s151] sm:$0xf]
      %v161 = vld [vmem:[%s151 + $0x4] sm:$0xf]
      %v162 = vunpack.c.l.bf16 %v160
      %v163 = vunpack.c.l.bf16 %v161
      %v164 = vlaneseq
      %v165 = vshrl.u32 %v164, 7
      %v166 = vadd.s32 %v165, 8
      %v167 = vlaneseq
      %v168 = vand.u32 %v167, 127
      %v169 = vrot.slane %v162, 7
      %v170 = vrot.slane %v163, 7
      %vm171 = vcmp.lt.s32.totalorder %v165, 1
      %v172 = vsel %vm171, %v169, %v170
      %v173 = vsel %vm171, %v170, %v169
      %v174 = vrot.slane %v162, 1
      %v175 = vrot.slane %v163, 1
      %vm176 = vcmp.lt.s32.totalorder %v165, 7
      %v177 = vsel %vm176, %v174, %v175
      %v178 = vsel %vm176, %v175, %v174
      %vm179 = vcmp.ge.s32.totalorder %v165, 1
      %vm180 = vcmp.ge.s32.totalorder %v166, 1
      %v181 = vsel %vm179, %v173, 0.0
      %v182 = vsel %vm180, %v172, 0.0
      %v183 = vadd.f32 %v162, %v181
      %v184 = vadd.f32 %v163, %v182
      %vm185 = vcmp.le.s32.totalorder %v165, 14
      %vm186 = vcmp.le.s32.totalorder %v166, 14
      %v187 = vsel %vm185, %v177, 0.0
      %v188 = vsel %vm186, %v178, 0.0
      %v189 = vadd.f32 %v183, %v187
      %v190 = vadd.f32 %v184, %v188
      %191 = vrot.lane.b32.xlu0 %v189, 1
      %v192 = vpop.permute.xlu0 %191
      %193 = vrot.lane.b32.xlu0 %v190, 1
      %v194 = vpop.permute.xlu0 %193
      %195 = vrot.lane.b32.xlu0 %v189, 127
      %v196 = vpop.permute.xlu0 %195
      %197 = vrot.lane.b32.xlu0 %v190, 127
      %v198 = vpop.permute.xlu0 %197
      %vm199 = vcmp.ge.s32.totalorder %v168, 1
      %v200 = vsel %vm199, %v192, 0.0
      %v201 = vsel %vm199, %v194, 0.0
      %v202 = vadd.f32 %v189, %v200
      %v203 = vadd.f32 %v190, %v201
      %vm204 = vcmp.le.s32.totalorder %v168, 126
      %v205 = vsel %vm204, %v196, 0.0
      %v206 = vsel %vm204, %v198, 0.0
      %v207 = vadd.f32 %v202, %v205
      %v208 = vadd.f32 %v203, %v206
      %v209 = vmul.f32 %v162, 9.0
      %v210 = vmul.f32 %v163, 9.0
      %v211 = vsub.f32 %v209, %v207
      %v212 = vsub.f32 %v210, %v208
      %v213 = vmax.f32 %v211, 0.0
      %v214 = vmax.f32 %v212, 0.0
      %vm215 = vcmp.gt.f32.partialorder %v213, 0.1
      %vm216 = vcmp.gt.f32.partialorder %v214, 0.1
      %v217 = vsel %vm215, 1, 0
      %v218 = vsel %vm216, 1, 0
      %v219 = vcvt.s32.f32 %v217
      %v220 = vcvt.s32.f32 %v218
      %v221 = vand.u32 %v165, 1
      %v222 = vand.u32 %v166, 1
      %vm223 = vcmp.eq.s32.totalorder %v221, 0
      %vm224 = vcmp.eq.s32.totalorder %v222, 0
      %v225 = vand.u32 %v168, 1
      %vm226 = vcmp.eq.s32.totalorder %v225, 0
      %v227 = vand.u32 %v165, 3
      %v228 = vand.u32 %v166, 3
      %vm229 = vcmp.lt.s32.totalorder %v227, 2
      %vm230 = vcmp.lt.s32.totalorder %v228, 2
      %v231 = vand.u32 %v168, 3
      %vm232 = vcmp.lt.s32.totalorder %v231, 2
      %v233 = vrot.slane %v213, 7
      %v234 = vrot.slane %v214, 7
      %v235 = vsel %vm171, %v233, %v234
      %v236 = vsel %vm171, %v234, %v233
      %v237 = vsel %vm223, %v213, %v236
      %v238 = vsel %vm224, %v214, %v235
      %v239 = vrot.slane %v237, 6
      %v240 = vrot.slane %v238, 6
      %vm241 = vcmp.lt.s32.totalorder %v165, 2
      %v242 = vsel %vm241, %v239, %v240
      %v243 = vsel %vm241, %v240, %v239
      %v244 = vsel %vm229, %v237, %v243
      %v245 = vsel %vm230, %v238, %v242
      %246 = vrot.lane.b32.xlu0 %v237, 1
      %v247 = vpop.permute.xlu0 %246
      %248 = vrot.lane.b32.xlu0 %v238, 1
      %v249 = vpop.permute.xlu0 %248
      %v250 = vsel %vm226, %v237, %v247
      %v251 = vsel %vm226, %v238, %v249
      %252 = vrot.lane.b32.xlu0 %v244, 1
      %v253 = vpop.permute.xlu0 %252
      %254 = vrot.lane.b32.xlu0 %v245, 1
      %v255 = vpop.permute.xlu0 %254
      %v256 = vsel %vm226, %v244, %v253
      %v257 = vsel %vm226, %v245, %v255
      %258 = vrot.lane.b32.xlu0 %v256, 2
      %v259 = vpop.permute.xlu0 %258
      %260 = vrot.lane.b32.xlu0 %v257, 2
      %v261 = vpop.permute.xlu0 %260
      %v262 = vsel %vm232, %v256, %v259
      %v263 = vsel %vm232, %v257, %v261
      %vm264 = vcmp.gt.f32.partialorder %v250, 0.1
      %vm265 = vcmp.gt.f32.partialorder %v251, 0.1
      %v266 = vsel %vm264, 1, 0
      %v267 = vsel %vm265, 1, 0
      %v268 = vcvt.s32.f32 %v266
      %v269 = vcvt.s32.f32 %v267
      %vm270 = vcmp.gt.f32.partialorder %v262, 0.1
      %vm271 = vcmp.gt.f32.partialorder %v263, 0.1
      %v272 = vsel %vm270, 1, 0
      %v273 = vsel %vm271, 1, 0
      %v274 = vcvt.s32.f32 %v272
      %v275 = vcvt.s32.f32 %v273
      %v276 = vmul.f32 %v219, 0.6
      %v277 = vmul.f32 %v220, 0.6
      %v278 = vmul.f32 %v268, 0.3
      %v279 = vmul.f32 %v269, 0.3
      %v280 = vadd.f32 %v276, %v278
      %v281 = vadd.f32 %v277, %v279
      %v282 = vmul.f32 %v274, 0.1
      %v283 = vmul.f32 %v275, 0.1
      %v284 = vadd.f32 %v280, %v282
      %v285 = vadd.f32 %v281, %v283
      %vm286 = vcmp.gt.f32.partialorder %v284, 0.1
      %vm287 = vcmp.gt.f32.partialorder %v285, 0.1
      %v288 = vsel %vm286, 1, 0
      %v289 = vsel %vm287, 1, 0
      %v290 = vcvt.s32.f32 %v288
      %v291 = vcvt.s32.f32 %v289
      %v292 = vld [vmem:[%s156] sm:$0xff]
      %v293 = vld [vmem:[%s156 + $0x8] sm:$0xff]
      %v294 = vand.u32 2147483647, %v292
      %v295 = vand.u32 2147483647, %v293
      %v296 = vsub.f32 0.0, %v294
      %v297 = vsub.f32 0.0, %v295
      %v298 = vmul.f32 %v296, 1.442695
      %v299 = vpow.pop %v298
      %v300 = vmul.f32 %v297, 1.442695
      %v301 = vpow.pop %v300
      %v302 = vmax.f32 %v292, 0.0
      %v303 = vmax.f32 %v293, 0.0
      %v304 = vmul.f32 %v292, %v290
      %v305 = vmul.f32 %v293, %v291
      %v306 = vsub.f32 %v302, %v304
      %v307 = vsub.f32 %v303, %v305
      %v308 = vadd.f32 %v299, 1.0
      %v309 = vlog2.pop %v308
      %v310 = vmul.f32 %v309, 0.6931472
      %v311 = vmul.f32 -0.5, %v299
      %v312 = vadd.f32 %v311, 1.0
      %v313 = vmul.f32 %v312, %v299
      %v314 = vand.u32 2147483647, %v299
      %vm315 = vcmp.lt.f32.partialorder %v314, 0.0004427343
      %v316 = vsel %vm315, %v313, %v310
      %v317 = vadd.f32 %v301, 1.0
      %v318 = vlog2.pop %v317
      %v319 = vmul.f32 %v318, 0.6931472
      %v320 = vmul.f32 -0.5, %v301
      %v321 = vadd.f32 %v320, 1.0
      %v322 = vmul.f32 %v321, %v301
      %v323 = vand.u32 2147483647, %v301
      %vm324 = vcmp.lt.f32.partialorder %v323, 0.0004427343
      %v325 = vsel %vm324, %v322, %v319
      %v326 = vadd.f32 %v306, %v316
      %v327 = vadd.f32 %v307, %v325
      %vm328 = vcmp.ge.f32.partialorder %v292, 0.0
      %vm329 = vcmp.ge.f32.partialorder %v293, 0.0
      %v330 = vsel %vm328, 1.0, %v299
      %v331 = vsel %vm329, 1.0, %v301
      %v332 = vadd.f32 %v299, 1.0
      %v333 = vadd.f32 %v301, 1.0
      %v334 = vrcp.pop %v332
      %v335 = vmul.f32 %v330, %v334
      %v336 = vrcp.pop %v333
      %v337 = vmul.f32 %v331, %v336
      %v338 = vadd.f32 %v326, %v327
      %339 = vadd.xlane.f32.xlu0 %v338
      %v340 = vpop.xlane.xlu0 %339
      %v341 = vrot.slane %v340, 4
      %v342 = vadd.f32 %v340, %v341
      %v343 = vrot.slane %v342, 2
      %v344 = vadd.f32 %v342, %v343
      %v345 = vrot.slane %v344, 1
      %v346 = vadd.f32 %v344, %v345
      %s347 = vtos %v346
      %v348 = vmul.f32 %v335, %v290
      %v349 = vmul.f32 %v337, %v291
      %v350 = vadd.f32 %v348, %v349
      %351 = vadd.xlane.f32.xlu0 %v350
      %v352 = vpop.xlane.xlu0 %351
      %v353 = vrot.slane %v352, 4
      %v354 = vadd.f32 %v352, %v353
      %v355 = vrot.slane %v354, 2
      %v356 = vadd.f32 %v354, %v355
      %v357 = vrot.slane %v356, 1
      %v358 = vadd.f32 %v356, %v357
      %s359 = vtos %v358
      %v360 = vadd.f32 %v335, %v337
      %361 = vadd.xlane.f32.xlu0 %v360
      %v362 = vpop.xlane.xlu0 %361
      %v363 = vrot.slane %v362, 4
      %v364 = vadd.f32 %v362, %v363
      %v365 = vrot.slane %v364, 2
      %v366 = vadd.f32 %v364, %v365
      %v367 = vrot.slane %v366, 1
      %v368 = vadd.f32 %v366, %v367
      %s369 = vtos %v368
      %v370 = vadd.f32 %v290, %v291
      %371 = vadd.xlane.f32.xlu0 %v370
      %v372 = vpop.xlane.xlu0 %371
      %v373 = vrot.slane %v372, 4
      %v374 = vadd.f32 %v372, %v373
      %v375 = vrot.slane %v374, 2
      %v376 = vadd.f32 %v374, %v375
      %v377 = vrot.slane %v376, 1
      %v378 = vadd.f32 %v376, %v377
      %s379 = vtos %v378
      %vm380 = vcmp.eq.s32.totalorder %v168, 0
      %v381 = vstv %s347
      %v382 = vsel %vm380, %v381, 0.0
      %vm383 = vcmp.eq.s32.totalorder %v168, 1
      %v384 = vstv %s359
      %v385 = vsel %vm383, %v384, 0.0
      %v386 = vadd.f32 %v382, %v385
      %vm387 = vcmp.eq.s32.totalorder %v168, 2
      %v388 = vstv %s369
      %v389 = vsel %vm387, %v388, 0.0
      %v390 = vadd.f32 %v386, %v389
      %vm391 = vcmp.eq.s32.totalorder %v168, 3
      %v392 = vstv %s379
      %v393 = vsel %vm391, %v392, 0.0
      %v394 = vadd.f32 %v390, %v393
      %395 = vst [vmem:[%s159] sm:$0x1] %v394
      %p396 = scmp.lt.s32.totalorder %s13, 1
      %s397 = scalar_select %p396, %s13, 1
      %s398 = scalar_lea.vmem %s2, %s397
      // Predicated region
      $region29: #{detail_aggregate_loss.1} parent=27 // pred_check
        %p399 = pneg %p83
      $region30: #{detail_aggregate_loss.1} parent=27 // pred_check_branch
        %401 = sbr.rel (%p399) target = $region32
      $region31: #{detail_aggregate_loss.1} parent=27 // pred_region
        _
      $region32: #{detail_aggregate_loss.1} parent=27 // pred_fallthru
        _
    $region28: #{detail_aggregate_loss.1} parent=5 // pred_fallthru
      _
    %p402 = scmp.le.s32.totalorder 2, %s8
    // Predicated region
    $region33: #{detail_aggregate_loss.1} parent=5 // pred_check
      %p403 = pneg %p402
    $region34: #{detail_aggregate_loss.1} parent=5 // pred_check_branch
      %405 = sbr.rel (%p403) target = $region36
    $region35: #{detail_aggregate_loss.1} parent=5 // pred_region
      %s406 = ssub.s32 %s8, 2
      // Predicated region
      $region37: #{detail_aggregate_loss.1} parent=35 // pred_check
        %p407 = pneg %p89
      $region38: #{detail_aggregate_loss.1} parent=35 // pred_check_branch
        %409 = sbr.rel (%p407) target = $region40
      $region39: #{detail_aggregate_loss.1} parent=35 // pred_region
        %p410 = scmp.lt.s32.totalorder %s14, 1
        %s411 = scalar_select %p410, %s14, 1
        %s412 = scalar_lea.vmem %s2, %s411
      $region40: #{detail_aggregate_loss.1} parent=35 // pred_fallthru
        _
    $region36: #{detail_aggregate_loss.1} parent=5 // pred_fallthru
      _
  $region6: #{detail_aggregate_loss.1} parent=0 // loop_footer
    %s12 = sadd.s32 1, %s8
  $region7: #{detail_aggregate_loss.1} parent=0 // loop_footer_branch
    %7 = sbr.rel target = $region3
  $region8: #{detail_aggregate_loss.1} parent=0 // loop_exit
    _

</llo_original>
